<compile_context>
chip_gen: v7x
topology: tpu7x:2x2x1
jax: 0.10.0
libtpu: 0.0.40
codegen_flags: <defaults>
</compile_context>

<pallas_src>
from functools import partial

import jax
import jax.numpy as jnp
from jax.experimental import pallas as pl
from jax.experimental.pallas import tpu as pltpu

EPS = 1e-5


@partial(jax.jit, static_argnames=("ksize",))
def convblock_forward(x, weight, bias, gamma, beta, ksize=3):
    # Conv bias is a mathematical no-op under training-mode BN (the batch-mean
    # subtraction cancels it exactly), so it never reaches the kernel.
    del bias

    n, c_in, h, w = x.shape
    c_out = weight.shape[0]
    k = ksize
    assert k % 2 == 1, "only odd kernel sizes (same padding) supported"
    r = k // 2
    hw = h * w
    kkc = k * k * c_in

    # Padded flat-spatial length: bottom pad r+1 rows; top pad >= r+1 rows, bumped so
    # the interior copy offset (pad_top*w) is a multiple of 128 lanes (cheap insurance:
    # keeps the in-kernel interior store on the aligned path).
    pad_bot = r + 1
    pad_top = r + 1
    for p in range(r + 1, r + 1 + 128):
        if (p * w) % 128 == 0:
            pad_top = p
            break
    lp = (h + pad_top + pad_bot) * w

    # Wrapper-side work is reshapes + tiny weight repack only (no activation passes).
    x_flat = x.reshape(n, c_in, hw)                                  # free view, f32
    w_taps = (weight.transpose(0, 2, 3, 1)                          # [C_out, K, K, C_in]
              .reshape(c_out, kkc).astype(jnp.bfloat16))            # tap-stacked GEMM lhs
    g2 = gamma.reshape(c_out, 1).astype(jnp.float32)
    b2 = beta.reshape(c_out, 1).astype(jnp.float32)

    def fused_kernel(x_ref, w_ref, g_ref, b_ref, o_ref, xp_ref, slab_ref):
        # ---- deduped column-wrap masks (f32: no bf16 VPU widening on v5e) ----------
        col = jax.lax.broadcasted_iota(jnp.int32, (1, hw), 1) % w
        col_mask = {0: None}
        for dw in range(-r, r + 1):
            if dw != 0:
                col_mask[dw] = jnp.logical_and(col + dw >= 0,
                                               col + dw < w).astype(jnp.float32)

        # ---- zero the padded-input scratch once; pads stay zero thereafter ---------
        xp_ref[...] = jnp.zeros((c_in, lp), jnp.float32)

        wmat = w_ref[...]                                   # [C_out, K*K*C_in] bf16
        accs = []
        psum = jnp.zeros((c_out, 1), jnp.float32)
        psq = jnp.zeros((c_out, 1), jnp.float32)
        for b_idx in range(n):                              # static, tiny batch loop
            # in-kernel pad: copy this image's interior into the padded VMEM slab
            xp_ref[:, pad_top * w:pad_top * w + hw] = x_ref[b_idx]

            # stack the K*K taps into one [K*K*C_in, HW] slab (im2col done in VMEM)
            t = 0
            for dh in range(-r, r + 1):
                for dw in range(-r, r + 1):
                    base = (pad_top + dh) * w + dw          # static, always in-bounds
                    slab = xp_ref[:, base:base + hw]        # [C_in, HW] f32
                    m = col_mask[dw]
                    if m is not None:
                        slab = slab * m                     # wrapped columns -> 0
                    slab_ref[t * c_in:(t + 1) * c_in, :] = slab
                    t += 1

            # single 36-deep MXU contraction (bf16 operands, f32 accumulation)
            big = slab_ref[...].astype(jnp.bfloat16)        # [K*K*C_in, HW]
            acc = jnp.dot(wmat, big, preferred_element_type=jnp.float32)  # [C_out, HW]
            accs.append(acc)                                # stays in vregs
            psum = psum + jnp.sum(acc, axis=1, keepdims=True)
            psq = psq + jnp.sum(acc * acc, axis=1, keepdims=True)

        # ---- BatchNorm (training-mode batch stats) + ReLU, fully in-kernel ---------
        cnt = float(n * hw)
        mean = psum / cnt
        var = jnp.maximum(psq / cnt - mean * mean, 0.0)     # biased variance (train BN)
        scale = g_ref[...] * jax.lax.rsqrt(var + EPS)
        shift = b_ref[...] - mean * scale
        for b_idx in range(n):
            o_ref[b_idx] = jnp.maximum(accs[b_idx] * scale + shift, 0.0)

    # TODO(synk): on v7x (2 TensorCores) split batch/HW over a size-2 "parallel" grid
    # axis and combine per-core BN partials via CMEM/core_barrier; marginal at this size.
    out_flat = pl.pallas_call(
        fused_kernel,
        grid=(1,),
        in_specs=[
            pl.BlockSpec((n, c_in, hw), lambda i: (0, 0, 0)),
            pl.BlockSpec((c_out, kkc), lambda i: (0, 0)),
            pl.BlockSpec((c_out, 1), lambda i: (0, 0)),
            pl.BlockSpec((c_out, 1), lambda i: (0, 0)),
        ],
        out_specs=pl.BlockSpec((n, c_out, hw), lambda i: (0, 0, 0)),
        out_shape=jax.ShapeDtypeStruct((n, c_out, hw), jnp.float32),
        scratch_shapes=[
            pltpu.VMEM((c_in, lp), jnp.float32),            # height-padded input slab
            pltpu.VMEM((kkc, hw), jnp.float32),             # stacked-tap GEMM rhs
        ],
        compiler_params=pltpu.CompilerParams(
            dimension_semantics=("arbitrary",)),
    )(x_flat, w_taps, g2, b2)

    # [N, C_out, H*W] -> [N, C_out, H, W]: minor-dim split, no transpose pass.
    return out_flat.reshape(n, c_out, h, w)


def reference_forward(x, weight, bias, gamma, beta):
    y = jax.lax.conv_general_dilated(
        x, weight, window_strides=(1, 1), padding="SAME",
        dimension_numbers=("NCHW", "OIHW", "NCHW"),
        precision=jax.lax.Precision.HIGHEST)
    y = y + bias[None, :, None, None]
    mean = jnp.mean(y, axis=(0, 2, 3), keepdims=True)
    var = jnp.mean((y - mean) ** 2, axis=(0, 2, 3), keepdims=True)
    y = (y - mean) * jax.lax.rsqrt(var + EPS)
    y = y * gamma[None, :, None, None] + beta[None, :, None, None]
    return jnp.maximum(y, 0.0)


if __name__ == "__main__":
    # Small shapes consistent with the module: N=2, C_in=4, C_out=8, 16x16, k=3.
    N, C_IN, C_OUT, H, W, K = 2, 4, 8, 16, 16, 3

    key = jax.random.PRNGKey(0)
    kx, kw, kb, kg, kbt = jax.random.split(key, 5)

    x = jax.random.normal(kx, (N, C_IN, H, W), dtype=jnp.float32)
    fan_in = C_IN * K * K
    weight = jax.random.normal(kw, (C_OUT, C_IN, K, K), jnp.float32) / jnp.sqrt(fan_in)
    bias = jax.random.normal(kb, (C_OUT,), jnp.float32) * 0.1
    gamma = 1.0 + 0.1 * jax.random.normal(kg, (C_OUT,), jnp.float32)
    beta = 0.1 * jax.random.normal(kbt, (C_OUT,), jnp.float32)

    out = convblock_forward(x, weight, bias, gamma, beta, ksize=K)
    out = jax.block_until_ready(out)
    assert out.shape == (N, C_OUT, H, W)

    # The kernel feeds bf16 operands to the MXU (f32 accumulation); compare against an
    # f32 reference run on bf16-rounded conv operands. The bias is kept in the reference
    # to confirm that dropping it in the kernel is exact under train-mode BN.
    xr = x.astype(jnp.bfloat16).astype(jnp.float32)
    wr = weight.astype(jnp.bfloat16).astype(jnp.float32)
    ref = reference_forward(xr, wr, bias, gamma, beta)

    assert jnp.allclose(out, ref, atol=2e-3, rtol=2e-3), "mismatch vs JAX reference"

    print("KERNEL_OK")
</pallas_src>

<mosaic_0001>
module attributes {stable_mosaic.version = 11 : i64} {
  func.func @fused_kernel(%arg0: i32, %arg1: memref<2x4x256xf32, #tpu.memory_space<vmem>>, %arg2: memref<8x36xbf16, #tpu.memory_space<vmem>>, %arg3: memref<8x1xf32, #tpu.memory_space<vmem>>, %arg4: memref<8x1xf32, #tpu.memory_space<vmem>>, %arg5: memref<2x8x256xf32, #tpu.memory_space<vmem>>, %arg6: memref<4x416xf32, #tpu.memory_space<vmem>>, %arg7: memref<36x256xf32, #tpu.memory_space<vmem>>) attributes {dimension_semantics = [#tpu.dimension_semantics<arbitrary>], iteration_bounds = array<i64: 1>, scalar_prefetch = 0 : i64, scratch_operands = 2 : i64, tpu.core_type = #tpu.core_type<tc>, window_params = [{pipeline_mode = #tpu.pipeline_mode<synchronous>, transform_indices = @transform_0, window_bounds = array<i64: 2, 4, 256>}, {pipeline_mode = #tpu.pipeline_mode<synchronous>, transform_indices = @transform_1, window_bounds = array<i64: 8, 36>}, {pipeline_mode = #tpu.pipeline_mode<synchronous>, transform_indices = @transform_2, window_bounds = array<i64: 8, 1>}, {pipeline_mode = #tpu.pipeline_mode<synchronous>, transform_indices = @transform_3, window_bounds = array<i64: 8, 1>}, {pipeline_mode = #tpu.pipeline_mode<synchronous>, transform_indices = @transform_4, window_bounds = array<i64: 2, 8, 256>}]} {
    %0 = tpu.iota {dimensions = array<i32: 1>} : vector<1x256xi32>
    %c16_i32 = arith.constant 16 : i32
    %c0_i32 = arith.constant 0 : i32
    %1 = arith.cmpi eq, %c16_i32, %c0_i32 : i32
    %c1_i32 = arith.constant 1 : i32
    %2 = arith.select %1, %c1_i32, %c16_i32 : i32
    %3 = vector.broadcast %2 : i32 to vector<1x256xi32>
    %4 = arith.remsi %0, %3 : vector<1x256xi32>
    %c0_i32_0 = arith.constant 0 : i32
    %5 = vector.broadcast %c0_i32_0 : i32 to vector<1x256xi32>
    %6 = arith.cmpi ne, %4, %5 : vector<1x256xi32>
    %c0_i32_1 = arith.constant 0 : i32
    %7 = vector.broadcast %c0_i32_1 : i32 to vector<1x256xi32>
    %8 = arith.cmpi slt, %4, %7 : vector<1x256xi32>
    %c0_i32_2 = arith.constant 0 : i32
    %9 = arith.cmpi slt, %2, %c0_i32_2 : i32
    %10 = vector.broadcast %9 : i1 to vector<1x256xi1>
    %11 = vector.broadcast %10 : vector<1x256xi1> to vector<1x256xi1>
    %12 = arith.xori %8, %11 : vector<1x256xi1>
    %13 = arith.andi %12, %6 : vector<1x256xi1>
    %14 = vector.broadcast %2 : i32 to vector<1x256xi32>
    %15 = arith.addi %4, %14 : vector<1x256xi32>
    %16 = arith.select %13, %15, %4 : vector<1x256xi1>, vector<1x256xi32>
    %c-1_i32 = arith.constant -1 : i32
    %17 = vector.broadcast %c-1_i32 : i32 to vector<1x256xi32>
    %18 = arith.addi %16, %17 : vector<1x256xi32>
    %c0_i32_3 = arith.constant 0 : i32
    %19 = vector.broadcast %c0_i32_3 : i32 to vector<1x256xi32>
    %20 = arith.cmpi sge, %18, %19 : vector<1x256xi32>
    %c-1_i32_4 = arith.constant -1 : i32
    %21 = vector.broadcast %c-1_i32_4 : i32 to vector<1x256xi32>
    %22 = arith.addi %16, %21 : vector<1x256xi32>
    %c16_i32_5 = arith.constant 16 : i32
    %23 = vector.broadcast %c16_i32_5 : i32 to vector<1x256xi32>
    %24 = arith.cmpi slt, %22, %23 : vector<1x256xi32>
    %25 = arith.andi %20, %24 : vector<1x256xi1>
    %26 = arith.extui %25 : vector<1x256xi1> to vector<1x256xi32>
    %27 = arith.sitofp %26 : vector<1x256xi32> to vector<1x256xf32>
    %c1_i32_6 = arith.constant 1 : i32
    %28 = vector.broadcast %c1_i32_6 : i32 to vector<1x256xi32>
    %29 = arith.addi %16, %28 : vector<1x256xi32>
    %c0_i32_7 = arith.constant 0 : i32
    %30 = vector.broadcast %c0_i32_7 : i32 to vector<1x256xi32>
    %31 = arith.cmpi sge, %29, %30 : vector<1x256xi32>
    %c1_i32_8 = arith.constant 1 : i32
    %32 = vector.broadcast %c1_i32_8 : i32 to vector<1x256xi32>
    %33 = arith.addi %16, %32 : vector<1x256xi32>
    %c16_i32_9 = arith.constant 16 : i32
    %34 = vector.broadcast %c16_i32_9 : i32 to vector<1x256xi32>
    %35 = arith.cmpi slt, %33, %34 : vector<1x256xi32>
    %36 = arith.andi %31, %35 : vector<1x256xi1>
    %37 = arith.extui %36 : vector<1x256xi1> to vector<1x256xi32>
    %38 = arith.sitofp %37 : vector<1x256xi32> to vector<1x256xf32>
    %cst = arith.constant 0.000000e+00 : f32
    %39 = vector.broadcast %cst : f32 to vector<4x416xf32>
    %c0 = arith.constant 0 : index
    %c0_10 = arith.constant 0 : index
    %40 = vector.load %arg6[%c0, %c0_10] : memref<4x416xf32, #tpu.memory_space<vmem>>, vector<4x416xf32>
    tpu.vector_store %arg6[%c0, %c0_10], %39 {strides = array<i32>} : memref<4x416xf32, #tpu.memory_space<vmem>>, vector<4x416xf32>,
    %c0_11 = arith.constant 0 : index
    %c0_12 = arith.constant 0 : index
    %41 = vector.load %arg2[%c0_11, %c0_12] : memref<8x36xbf16, #tpu.memory_space<vmem>>, vector<8x36xbf16>
    %cst_13 = arith.constant 0.000000e+00 : f32
    %42 = vector.broadcast %cst_13 : f32 to vector<8x1xf32>
    %cst_14 = arith.constant 0.000000e+00 : f32
    %43 = vector.broadcast %cst_14 : f32 to vector<8x1xf32>
    %c0_15 = arith.constant 0 : index
    %c0_16 = arith.constant 0 : index
    %c0_17 = arith.constant 0 : index
    %44 = vector.load %arg1[%c0_15, %c0_16, %c0_17] : memref<2x4x256xf32, #tpu.memory_space<vmem>>, vector<1x4x256xf32>
    %45 = vector.shape_cast %44 : vector<1x4x256xf32> to vector<4x256xf32>
    %c0_18 = arith.constant 0 : index
    %c128 = arith.constant 128 : index
    %46 = vector.load %arg6[%c0_18, %c128] : memref<4x416xf32, #tpu.memory_space<vmem>>, vector<4x256xf32>
    tpu.vector_store %arg6[%c0_18, %c128], %45 {strides = array<i32>} : memref<4x416xf32, #tpu.memory_space<vmem>>, vector<4x256xf32>,
    %c0_19 = arith.constant 0 : index
    %c111 = arith.constant 111 : index
    %47 = vector.load %arg6[%c0_19, %c111] : memref<4x416xf32, #tpu.memory_space<vmem>>, vector<4x256xf32>
    %48 = vector.broadcast %27 : vector<1x256xf32> to vector<4x256xf32>
    %49 = arith.mulf %47, %48 : vector<4x256xf32>
    %c0_20 = arith.constant 0 : index
    %c0_21 = arith.constant 0 : index
    %50 = vector.load %arg7[%c0_20, %c0_21] : memref<36x256xf32, #tpu.memory_space<vmem>>, vector<4x256xf32>
    tpu.vector_store %arg7[%c0_20, %c0_21], %49 {strides = array<i32>} : memref<36x256xf32, #tpu.memory_space<vmem>>, vector<4x256xf32>,
    %c0_22 = arith.constant 0 : index
    %c112 = arith.constant 112 : index
    %51 = vector.load %arg6[%c0_22, %c112] : memref<4x416xf32, #tpu.memory_space<vmem>>, vector<4x256xf32>
    %c4 = arith.constant 4 : index
    %c0_23 = arith.constant 0 : index
    %52 = vector.load %arg7[%c4, %c0_23] : memref<36x256xf32, #tpu.memory_space<vmem>>, vector<4x256xf32>
    tpu.vector_store %arg7[%c4, %c0_23], %51 {strides = array<i32>} : memref<36x256xf32, #tpu.memory_space<vmem>>, vector<4x256xf32>,
    %c0_24 = arith.constant 0 : index
    %c113 = arith.constant 113 : index
    %53 = vector.load %arg6[%c0_24, %c113] : memref<4x416xf32, #tpu.memory_space<vmem>>, vector<4x256xf32>
    %54 = vector.broadcast %38 : vector<1x256xf32> to vector<4x256xf32>
    %55 = arith.mulf %53, %54 : vector<4x256xf32>
    %c8 = arith.constant 8 : index
    %c0_25 = arith.constant 0 : index
    %56 = vector.load %arg7[%c8, %c0_25] : memref<36x256xf32, #tpu.memory_space<vmem>>, vector<4x256xf32>
    tpu.vector_store %arg7[%c8, %c0_25], %55 {strides = array<i32>} : memref<36x256xf32, #tpu.memory_space<vmem>>, vector<4x256xf32>,
    %c0_26 = arith.constant 0 : index
    %c127 = arith.constant 127 : index
    %57 = vector.load %arg6[%c0_26, %c127] : memref<4x416xf32, #tpu.memory_space<vmem>>, vector<4x256xf32>
    %58 = vector.broadcast %27 : vector<1x256xf32> to vector<4x256xf32>
    %59 = arith.mulf %57, %58 : vector<4x256xf32>
    %c12 = arith.constant 12 : index
    %c0_27 = arith.constant 0 : index
    %60 = vector.load %arg7[%c12, %c0_27] : memref<36x256xf32, #tpu.memory_space<vmem>>, vector<4x256xf32>
    tpu.vector_store %arg7[%c12, %c0_27], %59 {strides = array<i32>} : memref<36x256xf32, #tpu.memory_space<vmem>>, vector<4x256xf32>,
    %c0_28 = arith.constant 0 : index
    %c128_29 = arith.constant 128 : index
    %61 = vector.load %arg6[%c0_28, %c128_29] : memref<4x416xf32, #tpu.memory_space<vmem>>, vector<4x256xf32>
    %c16 = arith.constant 16 : index
    %c0_30 = arith.constant 0 : index
    %62 = vector.load %arg7[%c16, %c0_30] : memref<36x256xf32, #tpu.memory_space<vmem>>, vector<4x256xf32>
    tpu.vector_store %arg7[%c16, %c0_30], %61 {strides = array<i32>} : memref<36x256xf32, #tpu.memory_space<vmem>>, vector<4x256xf32>,
    %c0_31 = arith.constant 0 : index
    %c129 = arith.constant 129 : index
    %63 = vector.load %arg6[%c0_31, %c129] : memref<4x416xf32, #tpu.memory_space<vmem>>, vector<4x256xf32>
    %64 = vector.broadcast %38 : vector<1x256xf32> to vector<4x256xf32>
    %65 = arith.mulf %63, %64 : vector<4x256xf32>
    %c20 = arith.constant 20 : index
    %c0_32 = arith.constant 0 : index
    %66 = vector.load %arg7[%c20, %c0_32] : memref<36x256xf32, #tpu.memory_space<vmem>>, vector<4x256xf32>
    tpu.vector_store %arg7[%c20, %c0_32], %65 {strides = array<i32>} : memref<36x256xf32, #tpu.memory_space<vmem>>, vector<4x256xf32>,
    %c0_33 = arith.constant 0 : index
    %c143 = arith.constant 143 : index
    %67 = vector.load %arg6[%c0_33, %c143] : memref<4x416xf32, #tpu.memory_space<vmem>>, vector<4x256xf32>
    %68 = vector.broadcast %27 : vector<1x256xf32> to vector<4x256xf32>
    %69 = arith.mulf %67, %68 : vector<4x256xf32>
    %c24 = arith.constant 24 : index
    %c0_34 = arith.constant 0 : index
    %70 = vector.load %arg7[%c24, %c0_34] : memref<36x256xf32, #tpu.memory_space<vmem>>, vector<4x256xf32>
    tpu.vector_store %arg7[%c24, %c0_34], %69 {strides = array<i32>} : memref<36x256xf32, #tpu.memory_space<vmem>>, vector<4x256xf32>,
    %c0_35 = arith.constant 0 : index
    %c144 = arith.constant 144 : index
    %71 = vector.load %arg6[%c0_35, %c144] : memref<4x416xf32, #tpu.memory_space<vmem>>, vector<4x256xf32>
    %c28 = arith.constant 28 : index
    %c0_36 = arith.constant 0 : index
    %72 = vector.load %arg7[%c28, %c0_36] : memref<36x256xf32, #tpu.memory_space<vmem>>, vector<4x256xf32>
    tpu.vector_store %arg7[%c28, %c0_36], %71 {strides = array<i32>} : memref<36x256xf32, #tpu.memory_space<vmem>>, vector<4x256xf32>,
    %c0_37 = arith.constant 0 : index
    %c145 = arith.constant 145 : index
    %73 = vector.load %arg6[%c0_37, %c145] : memref<4x416xf32, #tpu.memory_space<vmem>>, vector<4x256xf32>
    %74 = vector.broadcast %38 : vector<1x256xf32> to vector<4x256xf32>
    %75 = arith.mulf %73, %74 : vector<4x256xf32>
    %c32 = arith.constant 32 : index
    %c0_38 = arith.constant 0 : index
    %76 = vector.load %arg7[%c32, %c0_38] : memref<36x256xf32, #tpu.memory_space<vmem>>, vector<4x256xf32>
    tpu.vector_store %arg7[%c32, %c0_38], %75 {strides = array<i32>} : memref<36x256xf32, #tpu.memory_space<vmem>>, vector<4x256xf32>,
    %c0_39 = arith.constant 0 : index
    %c0_40 = arith.constant 0 : index
    %77 = vector.load %arg7[%c0_39, %c0_40] : memref<36x256xf32, #tpu.memory_space<vmem>>, vector<36x256xf32>
    %78 = arith.truncf %77 : vector<36x256xf32> to vector<36x256xbf16>
    %cst_41 = arith.constant dense<0.000000e+00> : vector<8x256xf32>
    %79 = tpu.matmul %41, %78, %cst_41 {dimension_numbers = #tpu.dot_dimension_numbers<[1], [0], [0], [1], [0, 0, 1, 1], [], []>} : vector<8x36xbf16>, vector<36x256xbf16>, vector<8x256xf32> -> vector<8x256xf32>
    %cst_42 = arith.constant dense<0.000000e+00> : vector<8xf32>
    %80 = vector.multi_reduction <add>, %79, %cst_42 [1] : vector<8x256xf32> to vector<8xf32>
    %81 = vector.shape_cast %80 : vector<8xf32> to vector<8x1xf32>
    %82 = arith.addf %42, %81 : vector<8x1xf32>
    %83 = arith.mulf %79, %79 : vector<8x256xf32>
    %cst_43 = arith.constant dense<0.000000e+00> : vector<8xf32>
    %84 = vector.multi_reduction <add>, %83, %cst_43 [1] : vector<8x256xf32> to vector<8xf32>
    %85 = vector.shape_cast %84 : vector<8xf32> to vector<8x1xf32>
    %86 = arith.addf %43, %85 : vector<8x1xf32>
    %c1 = arith.constant 1 : index
    %c0_44 = arith.constant 0 : index
    %c0_45 = arith.constant 0 : index
    %87 = vector.load %arg1[%c1, %c0_44, %c0_45] : memref<2x4x256xf32, #tpu.memory_space<vmem>>, vector<1x4x256xf32>
    %88 = vector.shape_cast %87 : vector<1x4x256xf32> to vector<4x256xf32>
    %c0_46 = arith.constant 0 : index
    %c128_47 = arith.constant 128 : index
    %89 = vector.load %arg6[%c0_46, %c128_47] : memref<4x416xf32, #tpu.memory_space<vmem>>, vector<4x256xf32>
    tpu.vector_store %arg6[%c0_46, %c128_47], %88 {strides = array<i32>} : memref<4x416xf32, #tpu.memory_space<vmem>>, vector<4x256xf32>,
    %c0_48 = arith.constant 0 : index
    %c111_49 = arith.constant 111 : index
    %90 = vector.load %arg6[%c0_48, %c111_49] : memref<4x416xf32, #tpu.memory_space<vmem>>, vector<4x256xf32>
    %91 = vector.broadcast %27 : vector<1x256xf32> to vector<4x256xf32>
    %92 = arith.mulf %90, %91 : vector<4x256xf32>
    %c0_50 = arith.constant 0 : index
    %c0_51 = arith.constant 0 : index
    %93 = vector.load %arg7[%c0_50, %c0_51] : memref<36x256xf32, #tpu.memory_space<vmem>>, vector<4x256xf32>
    tpu.vector_store %arg7[%c0_50, %c0_51], %92 {strides = array<i32>} : memref<36x256xf32, #tpu.memory_space<vmem>>, vector<4x256xf32>,
    %c0_52 = arith.constant 0 : index
    %c112_53 = arith.constant 112 : index
    %94 = vector.load %arg6[%c0_52, %c112_53] : memref<4x416xf32, #tpu.memory_space<vmem>>, vector<4x256xf32>
    %c4_54 = arith.constant 4 : index
    %c0_55 = arith.constant 0 : index
    %95 = vector.load %arg7[%c4_54, %c0_55] : memref<36x256xf32, #tpu.memory_space<vmem>>, vector<4x256xf32>
    tpu.vector_store %arg7[%c4_54, %c0_55], %94 {strides = array<i32>} : memref<36x256xf32, #tpu.memory_space<vmem>>, vector<4x256xf32>,
    %c0_56 = arith.constant 0 : index
    %c113_57 = arith.constant 113 : index
    %96 = vector.load %arg6[%c0_56, %c113_57] : memref<4x416xf32, #tpu.memory_space<vmem>>, vector<4x256xf32>
    %97 = vector.broadcast %38 : vector<1x256xf32> to vector<4x256xf32>
    %98 = arith.mulf %96, %97 : vector<4x256xf32>
    %c8_58 = arith.constant 8 : index
    %c0_59 = arith.constant 0 : index
    %99 = vector.load %arg7[%c8_58, %c0_59] : memref<36x256xf32, #tpu.memory_space<vmem>>, vector<4x256xf32>
    tpu.vector_store %arg7[%c8_58, %c0_59], %98 {strides = array<i32>} : memref<36x256xf32, #tpu.memory_space<vmem>>, vector<4x256xf32>,
    %c0_60 = arith.constant 0 : index
    %c127_61 = arith.constant 127 : index
    %100 = vector.load %arg6[%c0_60, %c127_61] : memref<4x416xf32, #tpu.memory_space<vmem>>, vector<4x256xf32>
    %101 = vector.broadcast %27 : vector<1x256xf32> to vector<4x256xf32>
    %102 = arith.mulf %100, %101 : vector<4x256xf32>
    %c12_62 = arith.constant 12 : index
    %c0_63 = arith.constant 0 : index
    %103 = vector.load %arg7[%c12_62, %c0_63] : memref<36x256xf32, #tpu.memory_space<vmem>>, vector<4x256xf32>
    tpu.vector_store %arg7[%c12_62, %c0_63], %102 {strides = array<i32>} : memref<36x256xf32, #tpu.memory_space<vmem>>, vector<4x256xf32>,
    %c0_64 = arith.constant 0 : index
    %c128_65 = arith.constant 128 : index
    %104 = vector.load %arg6[%c0_64, %c128_65] : memref<4x416xf32, #tpu.memory_space<vmem>>, vector<4x256xf32>
    %c16_66 = arith.constant 16 : index
    %c0_67 = arith.constant 0 : index
    %105 = vector.load %arg7[%c16_66, %c0_67] : memref<36x256xf32, #tpu.memory_space<vmem>>, vector<4x256xf32>
    tpu.vector_store %arg7[%c16_66, %c0_67], %104 {strides = array<i32>} : memref<36x256xf32, #tpu.memory_space<vmem>>, vector<4x256xf32>,
    %c0_68 = arith.constant 0 : index
    %c129_69 = arith.constant 129 : index
    %106 = vector.load %arg6[%c0_68, %c129_69] : memref<4x416xf32, #tpu.memory_space<vmem>>, vector<4x256xf32>
    %107 = vector.broadcast %38 : vector<1x256xf32> to vector<4x256xf32>
    %108 = arith.mulf %106, %107 : vector<4x256xf32>
    %c20_70 = arith.constant 20 : index
    %c0_71 = arith.constant 0 : index
    %109 = vector.load %arg7[%c20_70, %c0_71] : memref<36x256xf32, #tpu.memory_space<vmem>>, vector<4x256xf32>
    tpu.vector_store %arg7[%c20_70, %c0_71], %108 {strides = array<i32>} : memref<36x256xf32, #tpu.memory_space<vmem>>, vector<4x256xf32>,
    %c0_72 = arith.constant 0 : index
    %c143_73 = arith.constant 143 : index
    %110 = vector.load %arg6[%c0_72, %c143_73] : memref<4x416xf32, #tpu.memory_space<vmem>>, vector<4x256xf32>
    %111 = vector.broadcast %27 : vector<1x256xf32> to vector<4x256xf32>
    %112 = arith.mulf %110, %111 : vector<4x256xf32>
    %c24_74 = arith.constant 24 : index
    %c0_75 = arith.constant 0 : index
    %113 = vector.load %arg7[%c24_74, %c0_75] : memref<36x256xf32, #tpu.memory_space<vmem>>, vector<4x256xf32>
    tpu.vector_store %arg7[%c24_74, %c0_75], %112 {strides = array<i32>} : memref<36x256xf32, #tpu.memory_space<vmem>>, vector<4x256xf32>,
    %c0_76 = arith.constant 0 : index
    %c144_77 = arith.constant 144 : index
    %114 = vector.load %arg6[%c0_76, %c144_77] : memref<4x416xf32, #tpu.memory_space<vmem>>, vector<4x256xf32>
    %c28_78 = arith.constant 28 : index
    %c0_79 = arith.constant 0 : index
    %115 = vector.load %arg7[%c28_78, %c0_79] : memref<36x256xf32, #tpu.memory_space<vmem>>, vector<4x256xf32>
    tpu.vector_store %arg7[%c28_78, %c0_79], %114 {strides = array<i32>} : memref<36x256xf32, #tpu.memory_space<vmem>>, vector<4x256xf32>,
    %c0_80 = arith.constant 0 : index
    %c145_81 = arith.constant 145 : index
    %116 = vector.load %arg6[%c0_80, %c145_81] : memref<4x416xf32, #tpu.memory_space<vmem>>, vector<4x256xf32>
    %117 = vector.broadcast %38 : vector<1x256xf32> to vector<4x256xf32>
    %118 = arith.mulf %116, %117 : vector<4x256xf32>
    %c32_82 = arith.constant 32 : index
    %c0_83 = arith.constant 0 : index
    %119 = vector.load %arg7[%c32_82, %c0_83] : memref<36x256xf32, #tpu.memory_space<vmem>>, vector<4x256xf32>
    tpu.vector_store %arg7[%c32_82, %c0_83], %118 {strides = array<i32>} : memref<36x256xf32, #tpu.memory_space<vmem>>, vector<4x256xf32>,
    %c0_84 = arith.constant 0 : index
    %c0_85 = arith.constant 0 : index
    %120 = vector.load %arg7[%c0_84, %c0_85] : memref<36x256xf32, #tpu.memory_space<vmem>>, vector<36x256xf32>
    %121 = arith.truncf %120 : vector<36x256xf32> to vector<36x256xbf16>
    %cst_86 = arith.constant dense<0.000000e+00> : vector<8x256xf32>
    %122 = tpu.matmul %41, %121, %cst_86 {dimension_numbers = #tpu.dot_dimension_numbers<[1], [0], [0], [1], [0, 0, 1, 1], [], []>} : vector<8x36xbf16>, vector<36x256xbf16>, vector<8x256xf32> -> vector<8x256xf32>
    %cst_87 = arith.constant dense<0.000000e+00> : vector<8xf32>
    %123 = vector.multi_reduction <add>, %122, %cst_87 [1] : vector<8x256xf32> to vector<8xf32>
    %124 = vector.shape_cast %123 : vector<8xf32> to vector<8x1xf32>
    %125 = arith.addf %82, %124 : vector<8x1xf32>
    %126 = arith.mulf %122, %122 : vector<8x256xf32>
    %cst_88 = arith.constant dense<0.000000e+00> : vector<8xf32>
    %127 = vector.multi_reduction <add>, %126, %cst_88 [1] : vector<8x256xf32> to vector<8xf32>
    %128 = vector.shape_cast %127 : vector<8xf32> to vector<8x1xf32>
    %129 = arith.addf %86, %128 : vector<8x1xf32>
    %cst_89 = arith.constant 5.120000e+02 : f32
    %130 = vector.broadcast %cst_89 : f32 to vector<8x1xf32>
    %131 = arith.divf %125, %130 : vector<8x1xf32>
    %cst_90 = arith.constant 5.120000e+02 : f32
    %132 = vector.broadcast %cst_90 : f32 to vector<8x1xf32>
    %133 = arith.divf %129, %132 : vector<8x1xf32>
    %134 = arith.mulf %131, %131 : vector<8x1xf32>
    %135 = arith.subf %133, %134 : vector<8x1xf32>
    %cst_91 = arith.constant 0.000000e+00 : f32
    %136 = vector.broadcast %cst_91 : f32 to vector<8x1xf32>
    %137 = arith.maximumf %135, %136 : vector<8x1xf32>
    %c0_92 = arith.constant 0 : index
    %c0_93 = arith.constant 0 : index
    %138 = vector.load %arg3[%c0_92, %c0_93] : memref<8x1xf32, #tpu.memory_space<vmem>>, vector<8x1xf32>
    %cst_94 = arith.constant 9.99999974E-6 : f32
    %139 = vector.broadcast %cst_94 : f32 to vector<8x1xf32>
    %140 = arith.addf %137, %139 : vector<8x1xf32>
    %141 = math.rsqrt %140 : vector<8x1xf32>
    %142 = arith.mulf %138, %141 : vector<8x1xf32>
    %c0_95 = arith.constant 0 : index
    %c0_96 = arith.constant 0 : index
    %143 = vector.load %arg4[%c0_95, %c0_96] : memref<8x1xf32, #tpu.memory_space<vmem>>, vector<8x1xf32>
    %144 = arith.mulf %131, %142 : vector<8x1xf32>
    %145 = arith.subf %143, %144 : vector<8x1xf32>
    %146 = vector.broadcast %142 : vector<8x1xf32> to vector<8x256xf32>
    %147 = arith.mulf %79, %146 : vector<8x256xf32>
    %148 = vector.broadcast %145 : vector<8x1xf32> to vector<8x256xf32>
    %149 = arith.addf %147, %148 : vector<8x256xf32>
    %cst_97 = arith.constant 0.000000e+00 : f32
    %150 = vector.broadcast %cst_97 : f32 to vector<8x256xf32>
    %151 = arith.maximumf %149, %150 : vector<8x256xf32>
    %c0_98 = arith.constant 0 : index
    %c0_99 = arith.constant 0 : index
    %c0_100 = arith.constant 0 : index
    %152 = vector.load %arg5[%c0_98, %c0_99, %c0_100] : memref<2x8x256xf32, #tpu.memory_space<vmem>>, vector<1x8x256xf32>
    %153 = vector.shape_cast %152 : vector<1x8x256xf32> to vector<8x256xf32>
    %154 = vector.shape_cast %151 : vector<8x256xf32> to vector<1x8x256xf32>
    tpu.vector_store %arg5[%c0_98, %c0_99, %c0_100], %154 {strides = array<i32>} : memref<2x8x256xf32, #tpu.memory_space<vmem>>, vector<1x8x256xf32>,
    %155 = vector.broadcast %142 : vector<8x1xf32> to vector<8x256xf32>
    %156 = arith.mulf %122, %155 : vector<8x256xf32>
    %157 = vector.broadcast %145 : vector<8x1xf32> to vector<8x256xf32>
    %158 = arith.addf %156, %157 : vector<8x256xf32>
    %cst_101 = arith.constant 0.000000e+00 : f32
    %159 = vector.broadcast %cst_101 : f32 to vector<8x256xf32>
    %160 = arith.maximumf %158, %159 : vector<8x256xf32>
    %c1_102 = arith.constant 1 : index
    %c0_103 = arith.constant 0 : index
    %c0_104 = arith.constant 0 : index
    %161 = vector.load %arg5[%c1_102, %c0_103, %c0_104] : memref<2x8x256xf32, #tpu.memory_space<vmem>>, vector<1x8x256xf32>
    %162 = vector.shape_cast %161 : vector<1x8x256xf32> to vector<8x256xf32>
    %163 = vector.shape_cast %160 : vector<8x256xf32> to vector<1x8x256xf32>
    tpu.vector_store %arg5[%c1_102, %c0_103, %c0_104], %163 {strides = array<i32>} : memref<2x8x256xf32, #tpu.memory_space<vmem>>, vector<1x8x256xf32>,
    return
  }
  func.func @transform_0(%arg0: i32) -> (i32, i32, i32) {
    %c0_i32 = arith.constant 0 : i32
    %c0_i32_0 = arith.constant 0 : i32
    %c0_i32_1 = arith.constant 0 : i32
    %c0_i32_2 = arith.constant 0 : i32
    return %c0_i32, %c0_i32_0, %c0_i32_1 : i32, i32, i32
  }
  func.func @transform_1(%arg0: i32) -> (i32, i32) {
    %c0_i32 = arith.constant 0 : i32
    %c0_i32_0 = arith.constant 0 : i32
    %c0_i32_1 = arith.constant 0 : i32
    return %c0_i32, %c0_i32_0 : i32, i32
  }
  func.func @transform_2(%arg0: i32) -> (i32, i32) {
    %c0_i32 = arith.constant 0 : i32
    %c0_i32_0 = arith.constant 0 : i32
    %c0_i32_1 = arith.constant 0 : i32
    return %c0_i32, %c0_i32_0 : i32, i32
  }
  func.func @transform_3(%arg0: i32) -> (i32, i32) {
    %c0_i32 = arith.constant 0 : i32
    %c0_i32_0 = arith.constant 0 : i32
    %c0_i32_1 = arith.constant 0 : i32
    return %c0_i32, %c0_i32_0 : i32, i32
  }
  func.func @transform_4(%arg0: i32) -> (i32, i32, i32) {
    %c0_i32 = arith.constant 0 : i32
    %c0_i32_0 = arith.constant 0 : i32
    %c0_i32_1 = arith.constant 0 : i32
    %c0_i32_2 = arith.constant 0 : i32
    return %c0_i32, %c0_i32_0, %c0_i32_1 : i32, i32, i32
  }
}

</mosaic_0001>

<llo_original>
// kernel: convblock_forward.1
$region0: #{convblock_forward.1}
  #allocation0 [shape = 'u32[]', space=smem, size = 0x4, offset = 0x4, fixed_abs, tag = 'smem constant byte address 0x4 - core index']
  #allocation1 [shape = 'u32[144,128]{1,0:T(1,128)}', space=vmem, size = 0x12000, scoped, tag = 'internal scratch']
  #allocation2 [shape = 'f32[4,416]{1,0:T(4,128)}', space=vmem, size = 0x2000, scoped, tag = 'scratch operand']
  #allocation3 [shape = 'f32[36,256]{1,0:T(8,128)}', space=vmem, size = 0xa000, scoped, tag = 'scratch operand']
  %s0 = inlined_call_operand.vmem [shape: f32[2,4,256], index: 0, kind: input, shape index: {}]
  %s1 = inlined_call_operand.vmem [shape: bf16[8,36], index: 1, kind: input, shape index: {}]
  %s2 = inlined_call_operand.vmem [shape: f32[8,1], index: 2, kind: input, shape index: {}]
  %s3 = inlined_call_operand.vmem [shape: f32[8,1], index: 3, kind: input, shape index: {}]
  %s4 = inlined_call_operand.vmem [shape: f32[2,8,256], index: 4, kind: output, shape index: {}]
  %s5 = sld [smem:[#allocation0]]
  $region26: #{convblock_forward.1} parent=0
    _
  %s7 = ssub.s32 1, %s5
  %s8 = scalar_select 0, %s7, %s5
  // Predicated region
  $region2: #{convblock_forward.1} parent=0 // pred_check
    _
  $region3: #{convblock_forward.1} parent=0 // pred_check_branch
    %10 = sbr.rel (0) target = $region5
  $region4: #{convblock_forward.1} parent=0 // pred_region
    _
  $region5: #{convblock_forward.1} parent=0 // pred_fallthru
    _
  // Predicated region
  $region6: #{convblock_forward.1} parent=0 // pred_check
    _
  $region7: #{convblock_forward.1} parent=0 // pred_check_branch
    %12 = sbr.rel (0) target = $region9
  $region8: #{convblock_forward.1} parent=0 // pred_region
    _
  $region9: #{convblock_forward.1} parent=0 // pred_fallthru
    _
  // Predicated region
  $region10: #{convblock_forward.1} parent=0 // pred_check
    _
  $region11: #{convblock_forward.1} parent=0 // pred_check_branch
    %14 = sbr.rel (0) target = $region13
  $region12: #{convblock_forward.1} parent=0 // pred_region
    _
  $region13: #{convblock_forward.1} parent=0 // pred_fallthru
    _
  // Predicated region
  $region14: #{convblock_forward.1} parent=0 // pred_check
    _
  $region15: #{convblock_forward.1} parent=0 // pred_check_branch
    %16 = sbr.rel (0) target = $region17
  $region16: #{convblock_forward.1} parent=0 // pred_region
    _
  $region17: #{convblock_forward.1} parent=0 // pred_fallthru
    _
  %v18 = vlaneseq
  %v19 = vand.u32 %v18, 127
  %v20 = vadd.s32 %v19, 128
  %vm21 = vcmp.lt.s32.totalorder %v19, 0
  %v22 = vsub.s32 0, %v19
  %v23 = vsel %vm21, %v22, %v19
  %v24 = vshrl.u32 %v23, 4
  %v25 = vand.u32 %v23, 15
  %v26 = vsub.s32 0, %v25
  %v27 = vsel %vm21, %v26, %v25
  %vm28 = vcmp.lt.s32.totalorder %v20, 0
  %v29 = vsub.s32 0, %v20
  %v30 = vsel %vm28, %v29, %v20
  %v31 = vshrl.u32 %v30, 4
  %v32 = vand.u32 %v30, 15
  %v33 = vsub.s32 0, %v32
  %v34 = vsel %vm28, %v33, %v32
  %vm35 = vcmp.ne.s32.totalorder %v27, 0
  %vm36 = vcmp.ne.s32.totalorder %v34, 0
  %vm37 = vcmp.lt.s32.totalorder %v27, 0
  %vm38 = vcmp.lt.s32.totalorder %v34, 0
  %vm39 = vmand %vm37, %vm35
  %vm40 = vmand %vm38, %vm36
  %v41 = vadd.s32 %v27, 16
  %v42 = vadd.s32 %v34, 16
  %v43 = vsel %vm39, %v41, %v27
  %v44 = vsel %vm40, %v42, %v34
  %v45 = vadd.s32 %v43, 4294967295
  %v46 = vadd.s32 %v44, 4294967295
  %vm47 = vcmp.ge.s32.totalorder %v45, 0
  %vm48 = vcmp.ge.s32.totalorder %v46, 0
  %vm49 = vcmp.lt.s32.totalorder %v45, 16
  %vm50 = vcmp.lt.s32.totalorder %v46, 16
  %vm51 = vmand %vm47, %vm49
  %vm52 = vmand %vm48, %vm50
  %v53 = vsel %vm51, 1, 0
  %v54 = vsel %vm52, 1, 0
  %v55 = vcvt.s32.f32 %v53
  %v56 = vcvt.s32.f32 %v54
  %v57 = vadd.s32 %v43, 1
  %v58 = vadd.s32 %v44, 1
  %vm59 = vcmp.ge.s32.totalorder %v57, 0
  %vm60 = vcmp.ge.s32.totalorder %v58, 0
  %vm61 = vcmp.lt.s32.totalorder %v57, 16
  %vm62 = vcmp.lt.s32.totalorder %v58, 16
  %vm63 = vmand %vm59, %vm61
  %vm64 = vmand %vm60, %vm62
  %v65 = vsel %vm63, 1, 0
  %v66 = vsel %vm64, 1, 0
  %v67 = vcvt.s32.f32 %v65
  %v68 = vcvt.s32.f32 %v66
  %69 = vst [vmem:[#allocation2] sm:$0xff] 0.0
  %vm70 = vcmask 1043456
  %vm71 = vcmask 261124
  %vm72 = vmor %vm71, %vm70
  %73 = vst.msk [vmem:[#allocation2 + $0x8] sm:$0xff] %vm72, 0.0
  %v74 = vld [vmem:[%s1] sm:$0xf]
  %v75 = vld [vmem:[%s0] sm:$0xff]
  %76 = vst [vmem:[#allocation2 + $0x4] sm:$0xff] %v75
  %v77 = vld [vmem:[#allocation2] sm:$0xff]
  %v78 = vld [vmem:[#allocation2 + $0x8] sm:$0xf]
  %v81 = vcombine.low %v55, %v56
  %82 = vrot.lane.b32.xlu0 %v81, 111
  %v83 = vpop.permute.xlu0 %82
  %v84 = vrot.slane %v83, 4
  %vm85 = vcmask 908288
  %v86 = vsel %vm85, %v84, %v83
  %v89 = vmul.f32 %v77, %v86
  %v90 = vmul.f32 %v78, %v84
  %v93 = vcombine.high %v89, %v89
  %94 = vrot.lane.b32.xlu0 %v89, 17
  %v95 = vpop.permute.xlu0 %94
  %96 = vrot.lane.b32.xlu0 %v93, 17
  %v97 = vpop.permute.xlu0 %96
  %98 = vrot.lane.b32.xlu0 %v90, 17
  %v99 = vpop.permute.xlu0 %98
  %vm100 = vcmask 138240
  %v101 = vsel %vm100, %v95, %v97
  %v102 = vsel %vm100, %v97, %v99
  %105 = vst [vmem:[#allocation3] sm:$0xf] %v101
  %106 = vst [vmem:[#allocation3 + $0x8] sm:$0xf] %v102
  %v107 = vld [vmem:[#allocation2] sm:$0xff]
  %v108 = vld [vmem:[#allocation2 + $0x8] sm:$0xf]
  %v111 = vcombine.low %v107, %v107
  %v112 = vcombine.low %v108, %v108
  %113 = vrot.lane.b32.xlu0 %v111, 16
  %v114 = vpop.permute.xlu0 %113
  %115 = vrot.lane.b32.xlu0 %v107, 16
  %v116 = vpop.permute.xlu0 %115
  %117 = vrot.lane.b32.xlu0 %v112, 16
  %v118 = vpop.permute.xlu0 %117
  %vm119 = vcmask 130048
  %v120 = vsel %vm119, %v114, %v116
  %v121 = vsel %vm119, %v116, %v118
  %124 = vst [vmem:[#allocation3] sm:$0xf0] %v120
  %125 = vst [vmem:[#allocation3 + $0x8] sm:$0xf0] %v121
  %v126 = vld [vmem:[#allocation2] sm:$0xff]
  %v127 = vld [vmem:[#allocation2 + $0x8] sm:$0xf]
  %v130 = vcombine.low %v67, %v68
  %131 = vrot.lane.b32.xlu0 %v130, 113
  %v132 = vpop.permute.xlu0 %131
  %v133 = vrot.slane %v132, 4
  %vm134 = vcmask 924672
  %v135 = vsel %vm134, %v133, %v132
  %v138 = vmul.f32 %v126, %v135
  %v139 = vmul.f32 %v127, %v133
  %v142 = vcombine.high %v138, %v138
  %143 = vrot.lane.b32.xlu0 %v138, 15
  %v144 = vpop.permute.xlu0 %143
  %145 = vrot.lane.b32.xlu0 %v142, 15
  %v146 = vpop.permute.xlu0 %145
  %147 = vrot.lane.b32.xlu0 %v139, 15
  %v148 = vpop.permute.xlu0 %147
  %vm149 = vcmask 121856
  %v150 = vsel %vm149, %v144, %v146
  %v151 = vsel %vm149, %v146, %v148
  %154 = vst [vmem:[#allocation3 + $0x10] sm:$0xf] %v150
  %155 = vst [vmem:[#allocation3 + $0x18] sm:$0xf] %v151
  %v156 = vld [vmem:[#allocation2] sm:$0xff]
  %v157 = vld [vmem:[#allocation2 + $0x8] sm:$0xf]
  %158 = vrot.lane.b32.xlu0 %v81, 127
  %v159 = vpop.permute.xlu0 %158
  %v160 = vrot.slane %v159, 4
  %vm161 = vcmask 1039360
  %v162 = vsel %vm161, %v160, %v159
  %v165 = vmul.f32 %v156, %v162
  %v166 = vmul.f32 %v157, %v160
  %v169 = vcombine.low %v165, %v165
  %v170 = vcombine.low %v166, %v166
  %171 = vrot.lane.b32.xlu0 %v169, 1
  %v172 = vpop.permute.xlu0 %171
  %173 = vrot.lane.b32.xlu0 %v165, 1
  %v174 = vpop.permute.xlu0 %173
  %175 = vrot.lane.b32.xlu0 %v170, 1
  %v176 = vpop.permute.xlu0 %175
  %vm177 = vcmask 7168
  %v178 = vsel %vm177, %v172, %v174
  %v179 = vsel %vm177, %v174, %v176
  %182 = vst [vmem:[#allocation3 + $0x10] sm:$0xf0] %v178
  %183 = vst [vmem:[#allocation3 + $0x18] sm:$0xf0] %v179
  %v184 = vld [vmem:[#allocation2 + $0x4] sm:$0xff]
  %v186 = vcombine.high %v184, %v184
  %188 = vst [vmem:[#allocation3 + $0x20] sm:$0xf] %v184
  %189 = vst [vmem:[#allocation3 + $0x28] sm:$0xf] %v186
  %v190 = vld [vmem:[#allocation2 + $0x4] sm:$0xff]
  %v191 = vld [vmem:[#allocation2 + $0xc] sm:$0xf]
  %192 = vrot.lane.b32.xlu0 %v130, 1
  %v193 = vpop.permute.xlu0 %192
  %v194 = vrot.slane %v193, 4
  %v195 = vsel %vm177, %v194, %v193
  %v198 = vmul.f32 %v190, %v195
  %v199 = vmul.f32 %v191, %v194
  %v202 = vcombine.low %v198, %v198
  %v203 = vcombine.low %v199, %v199
  %204 = vrot.lane.b32.xlu0 %v202, 127
  %v205 = vpop.permute.xlu0 %204
  %206 = vrot.lane.b32.xlu0 %v198, 127
  %v207 = vpop.permute.xlu0 %206
  %208 = vrot.lane.b32.xlu0 %v203, 127
  %v209 = vpop.permute.xlu0 %208
  %v210 = vsel %vm161, %v205, %v207
  %v211 = vsel %vm161, %v207, %v209
  %214 = vst [vmem:[#allocation3 + $0x20] sm:$0xf0] %v210
  %215 = vst [vmem:[#allocation3 + $0x28] sm:$0xf0] %v211
  %v216 = vld [vmem:[#allocation2 + $0x4] sm:$0xff]
  %v217 = vld [vmem:[#allocation2 + $0xc] sm:$0xf]
  %218 = vrot.lane.b32.xlu0 %v81, 15
  %v219 = vpop.permute.xlu0 %218
  %v220 = vrot.slane %v219, 4
  %v221 = vsel %vm149, %v220, %v219
  %v224 = vmul.f32 %v216, %v221
  %v225 = vmul.f32 %v217, %v220
  %v228 = vcombine.high %v224, %v224
  %229 = vrot.lane.b32.xlu0 %v224, 113
  %v230 = vpop.permute.xlu0 %229
  %231 = vrot.lane.b32.xlu0 %v228, 113
  %v232 = vpop.permute.xlu0 %231
  %233 = vrot.lane.b32.xlu0 %v225, 113
  %v234 = vpop.permute.xlu0 %233
  %v235 = vsel %vm134, %v230, %v232
  %v236 = vsel %vm134, %v232, %v234
  %239 = vst [vmem:[#allocation3 + $0x30] sm:$0xf] %v235
  %240 = vst [vmem:[#allocation3 + $0x38] sm:$0xf] %v236
  %v241 = vld [vmem:[#allocation2 + $0x4] sm:$0xff]
  %v242 = vld [vmem:[#allocation2 + $0xc] sm:$0xf]
  %v245 = vcombine.low %v241, %v241
  %v246 = vcombine.low %v242, %v242
  %247 = vrot.lane.b32.xlu0 %v245, 112
  %v248 = vpop.permute.xlu0 %247
  %249 = vrot.lane.b32.xlu0 %v241, 112
  %v250 = vpop.permute.xlu0 %249
  %251 = vrot.lane.b32.xlu0 %v246, 112
  %v252 = vpop.permute.xlu0 %251
  %vm253 = vcmask 916480
  %v254 = vsel %vm253, %v248, %v250
  %v255 = vsel %vm253, %v250, %v252
  %258 = vst [vmem:[#allocation3 + $0x30] sm:$0xf0] %v254
  %259 = vst [vmem:[#allocation3 + $0x38] sm:$0xf0] %v255
  %v260 = vld [vmem:[#allocation2 + $0x4] sm:$0xff]
  %v261 = vld [vmem:[#allocation2 + $0xc] sm:$0xf]
  %262 = vrot.lane.b32.xlu0 %v130, 17
  %v263 = vpop.permute.xlu0 %262
  %v264 = vrot.slane %v263, 4
  %v265 = vsel %vm100, %v264, %v263
  %v268 = vmul.f32 %v260, %v265
  %v269 = vmul.f32 %v261, %v264
  %v272 = vcombine.high %v268, %v268
  %273 = vrot.lane.b32.xlu0 %v268, 111
  %v274 = vpop.permute.xlu0 %273
  %275 = vrot.lane.b32.xlu0 %v272, 111
  %v276 = vpop.permute.xlu0 %275
  %277 = vrot.lane.b32.xlu0 %v269, 111
  %v278 = vpop.permute.xlu0 %277
  %v279 = vsel %vm85, %v274, %v276
  %v280 = vsel %vm85, %v276, %v278
  %283 = vst [vmem:[#allocation3 + $0x40] sm:$0xf] %v279
  %284 = vst [vmem:[#allocation3 + $0x48] sm:$0xf] %v280
  %v285 = vld [vmem:[#allocation3] sm:$0xff]
  %v286 = vld [vmem:[#allocation3 + $0x8] sm:$0xff]
  %v287 = vld [vmem:[#allocation3 + $0x10] sm:$0xff]
  %v288 = vld [vmem:[#allocation3 + $0x18] sm:$0xff]
  %v289 = vld [vmem:[#allocation3 + $0x20] sm:$0xff]
  %v290 = vld [vmem:[#allocation3 + $0x28] sm:$0xff]
  %v291 = vld [vmem:[#allocation3 + $0x30] sm:$0xff]
  %v292 = vld [vmem:[#allocation3 + $0x38] sm:$0xff]
  %v293 = vld [vmem:[#allocation3 + $0x40] sm:$0xf]
  %v294 = vld [vmem:[#allocation3 + $0x48] sm:$0xf]
  %v295 = vpack.c.bf16 %v287, %v285
  %v296 = vpack.c.bf16 %v288, %v286
  %v297 = vpack.c.bf16 %v291, %v289
  %v298 = vpack.c.bf16 %v292, %v290
  %v299 = vpack.c.bf16 %v293, %v293
  %v300 = vpack.c.bf16 %v294, %v294
  %vm301 = vcmask 293888
  %v303 = vsel %vm301, %v74, 0
  %vm305 = vcmask 1041408
  %v307 = vsel %vm305, %v299, 0
  %v310 = vsel %vm305, %v300, 0
  %312 = vmatprep.subr.bf16.mxu0 %v296
  %313 = vmatpush1.bf16.msra.mxu0 %v295
  %314 = vmatprep.subr.bf16.mxu0 %v298
  %315 = vmatpush1.bf16.msra.mxu0 %v297
  %316 = vmatprep.subr.bf16.mxu0 %v310
  %317 = vmatpush1.bf16.msra.mxu0 %v307
  %318 = vmatprep.subr.bf16.mxu0 0
  %319 = vmatpush1.bf16.msra.mxu0 0
  %320 = vmatprep.subr.bf16.mxu0 0
  %321 = vmatpush1.bf16.msra.mxu0 0
  %322 = vmatprep.subr.bf16.mxu0 0
  %323 = vmatpush1.bf16.msra.mxu0 0
  %324 = vmatprep.subr.bf16.mxu0 0
  %325 = vmatpush1.bf16.msra.mxu0 0
  %326 = vmatprep.subr.bf16.mxu0 0
  %327 = vmatpush1.bf16.msra.mxu0 0
  %328 = vmatprep.subr.bf16.mxu0 0
  %329 = vmatpush1.bf16.msra.mxu0 0
  %330 = vmatprep.subr.bf16.mxu0 0
  %331 = vmatpush1.bf16.msra.mxu0 0
  %332 = vmatprep.subr.bf16.mxu0 0
  %333 = vmatpush1.bf16.msra.mxu0 0
  %334 = vmatprep.subr.bf16.mxu0 0
  %335 = vmatpush1.bf16.msra.mxu0 0
  %336 = vmatprep.subr.bf16.mxu0 0
  %337 = vmatpush1.bf16.msra.mxu0 0
  %338 = vmatprep.subr.bf16.mxu0 0
  %339 = vmatpush1.bf16.msra.mxu0 0
  %340 = vmatprep.subr.bf16.mxu0 0
  %341 = vmatpush1.bf16.msra.mxu0 0
  %342 = vmatprep.subr.bf16.mxu0 0
  %343 = vmatpush1.bf16.msra.mxu0 0
  %344 = vmatprep.mubr.bf16.mxu0 0
  %345 = vmatmul.mubr.bf16.gmra.mrb[0].mxu0 %v303
  %v346 = vpop.f32.mrb[0].mxu0
  %v347 = vadd.f32 0.0, %v346
  %v348 = vpop.f32.mrb[0].mxu0
  %v349 = vadd.f32 0.0, %v348
  %v350 = vpop.f32.mrb[0].mxu0
  %v351 = vpop.f32.mrb[0].mxu0
  %352 = vdwg.mxu0
  %v353 = vadd.f32 %v347, %v349
  %354 = vadd.xlane.f32.xlu0 %v353
  %v355 = vpop.xlane.xlu0 %354
  %v356 = vadd.f32 %v355, 0.0
  %v357 = vmul.f32 %v347, %v347
  %v358 = vmul.f32 %v349, %v349
  %v359 = vadd.f32 %v357, %v358
  %360 = vadd.xlane.f32.xlu0 %v359
  %v361 = vpop.xlane.xlu0 %360
  %v362 = vadd.f32 %v361, 0.0
  %s363 = scalar_lea.vmem %s0, 8
  %v364 = vld [vmem:[%s363] sm:$0xff]
  %365 = vst [vmem:[#allocation2 + $0x4] sm:$0xff] %v364
  %v366 = vld [vmem:[#allocation2] sm:$0xff]
  %v367 = vld [vmem:[#allocation2 + $0x8] sm:$0xf]
  %v368 = vmul.f32 %v366, %v86
  %v369 = vmul.f32 %v367, %v84
  %v372 = vcombine.high %v368, %v368
  %373 = vrot.lane.b32.xlu0 %v368, 17
  %v374 = vpop.permute.xlu0 %373
  %375 = vrot.lane.b32.xlu0 %v372, 17
  %v376 = vpop.permute.xlu0 %375
  %377 = vrot.lane.b32.xlu0 %v369, 17
  %v378 = vpop.permute.xlu0 %377
  %v379 = vsel %vm100, %v374, %v376
  %v380 = vsel %vm100, %v376, %v378
  %383 = vst [vmem:[#allocation3] sm:$0xf] %v379
  %384 = vst [vmem:[#allocation3 + $0x8] sm:$0xf] %v380
  %v385 = vld [vmem:[#allocation2] sm:$0xff]
  %v386 = vld [vmem:[#allocation2 + $0x8] sm:$0xf]
  %v389 = vcombine.low %v385, %v385
  %v390 = vcombine.low %v386, %v386
  %391 = vrot.lane.b32.xlu0 %v389, 16
  %v392 = vpop.permute.xlu0 %391
  %393 = vrot.lane.b32.xlu0 %v385, 16
  %v394 = vpop.permute.xlu0 %393
  %395 = vrot.lane.b32.xlu0 %v390, 16
  %v396 = vpop.permute.xlu0 %395
  %v397 = vsel %vm119, %v392, %v394
  %v398 = vsel %vm119, %v394, %v396
  %401 = vst [vmem:[#allocation3] sm:$0xf0] %v397
  %402 = vst [vmem:[#allocation3 + $0x8] sm:$0xf0] %v398
  %v403 = vld [vmem:[#allocation2] sm:$0xff]
  %v404 = vld [vmem:[#allocation2 + $0x8] sm:$0xf]
  %v405 = vmul.f32 %v403, %v135
  %v406 = vmul.f32 %v404, %v133
  %v409 = vcombine.high %v405, %v405
  %410 = vrot.lane.b32.xlu0 %v405, 15
  %v411 = vpop.permute.xlu0 %410
  %412 = vrot.lane.b32.xlu0 %v409, 15
  %v413 = vpop.permute.xlu0 %412
  %414 = vrot.lane.b32.xlu0 %v406, 15
  %v415 = vpop.permute.xlu0 %414
  %v416 = vsel %vm149, %v411, %v413
  %v417 = vsel %vm149, %v413, %v415
  %420 = vst [vmem:[#allocation3 + $0x10] sm:$0xf] %v416
  %421 = vst [vmem:[#allocation3 + $0x18] sm:$0xf] %v417
  %v422 = vld [vmem:[#allocation2] sm:$0xff]
  %v423 = vld [vmem:[#allocation2 + $0x8] sm:$0xf]
  %v424 = vmul.f32 %v422, %v162
  %v425 = vmul.f32 %v423, %v160
  %v428 = vcombine.low %v424, %v424
  %v429 = vcombine.low %v425, %v425
  %430 = vrot.lane.b32.xlu0 %v428, 1
  %v431 = vpop.permute.xlu0 %430
  %432 = vrot.lane.b32.xlu0 %v424, 1
  %v433 = vpop.permute.xlu0 %432
  %434 = vrot.lane.b32.xlu0 %v429, 1
  %v435 = vpop.permute.xlu0 %434
  %v436 = vsel %vm177, %v431, %v433
  %v437 = vsel %vm177, %v433, %v435
  %440 = vst [vmem:[#allocation3 + $0x10] sm:$0xf0] %v436
  %441 = vst [vmem:[#allocation3 + $0x18] sm:$0xf0] %v437
  %v442 = vld [vmem:[#allocation2 + $0x4] sm:$0xff]
  %v444 = vcombine.high %v442, %v442
  %446 = vst [vmem:[#allocation3 + $0x20] sm:$0xf] %v442
  %447 = vst [vmem:[#allocation3 + $0x28] sm:$0xf] %v444
  %v448 = vld [vmem:[#allocation2 + $0x4] sm:$0xff]
  %v449 = vld [vmem:[#allocation2 + $0xc] sm:$0xf]
  %v450 = vmul.f32 %v448, %v195
  %v451 = vmul.f32 %v449, %v194
  %v454 = vcombine.low %v450, %v450
  %v455 = vcombine.low %v451, %v451
  %456 = vrot.lane.b32.xlu0 %v454, 127
  %v457 = vpop.permute.xlu0 %456
  %458 = vrot.lane.b32.xlu0 %v450, 127
  %v459 = vpop.permute.xlu0 %458
  %460 = vrot.lane.b32.xlu0 %v455, 127
  %v461 = vpop.permute.xlu0 %460
  %v462 = vsel %vm161, %v457, %v459
  %v463 = vsel %vm161, %v459, %v461
  %466 = vst [vmem:[#allocation3 + $0x20] sm:$0xf0] %v462
  %467 = vst [vmem:[#allocation3 + $0x28] sm:$0xf0] %v463
  %v468 = vld [vmem:[#allocation2 + $0x4] sm:$0xff]
  %v469 = vld [vmem:[#allocation2 + $0xc] sm:$0xf]
  %v470 = vmul.f32 %v468, %v221
  %v471 = vmul.f32 %v469, %v220
  %v474 = vcombine.high %v470, %v470
  %475 = vrot.lane.b32.xlu0 %v470, 113
  %v476 = vpop.permute.xlu0 %475
  %477 = vrot.lane.b32.xlu0 %v474, 113
  %v478 = vpop.permute.xlu0 %477
  %479 = vrot.lane.b32.xlu0 %v471, 113
  %v480 = vpop.permute.xlu0 %479
  %v481 = vsel %vm134, %v476, %v478
  %v482 = vsel %vm134, %v478, %v480
  %485 = vst [vmem:[#allocation3 + $0x30] sm:$0xf] %v481
  %486 = vst [vmem:[#allocation3 + $0x38] sm:$0xf] %v482
  %v487 = vld [vmem:[#allocation2 + $0x4] sm:$0xff]
  %v488 = vld [vmem:[#allocation2 + $0xc] sm:$0xf]
  %v491 = vcombine.low %v487, %v487
  %v492 = vcombine.low %v488, %v488
  %493 = vrot.lane.b32.xlu0 %v491, 112
  %v494 = vpop.permute.xlu0 %493
  %495 = vrot.lane.b32.xlu0 %v487, 112
  %v496 = vpop.permute.xlu0 %495
  %497 = vrot.lane.b32.xlu0 %v492, 112
  %v498 = vpop.permute.xlu0 %497
  %v499 = vsel %vm253, %v494, %v496
  %v500 = vsel %vm253, %v496, %v498
  %503 = vst [vmem:[#allocation3 + $0x30] sm:$0xf0] %v499
  %504 = vst [vmem:[#allocation3 + $0x38] sm:$0xf0] %v500
  %v505 = vld [vmem:[#allocation2 + $0x4] sm:$0xff]
  %v506 = vld [vmem:[#allocation2 + $0xc] sm:$0xf]
  %v507 = vmul.f32 %v505, %v265
  %v508 = vmul.f32 %v506, %v264
  %v511 = vcombine.high %v507, %v507
  %512 = vrot.lane.b32.xlu0 %v507, 111
  %v513 = vpop.permute.xlu0 %512
  %514 = vrot.lane.b32.xlu0 %v511, 111
  %v515 = vpop.permute.xlu0 %514
  %516 = vrot.lane.b32.xlu0 %v508, 111
  %v517 = vpop.permute.xlu0 %516
  %v518 = vsel %vm85, %v513, %v515
  %v519 = vsel %vm85, %v515, %v517
  %522 = vst [vmem:[#allocation3 + $0x40] sm:$0xf] %v518
  %523 = vst [vmem:[#allocation3 + $0x48] sm:$0xf] %v519
  %v524 = vld [vmem:[#allocation3] sm:$0xff]
  %v525 = vld [vmem:[#allocation3 + $0x8] sm:$0xff]
  %v526 = vld [vmem:[#allocation3 + $0x10] sm:$0xff]
  %v527 = vld [vmem:[#allocation3 + $0x18] sm:$0xff]
  %v528 = vld [vmem:[#allocation3 + $0x20] sm:$0xff]
  %v529 = vld [vmem:[#allocation3 + $0x28] sm:$0xff]
  %v530 = vld [vmem:[#allocation3 + $0x30] sm:$0xff]
  %v531 = vld [vmem:[#allocation3 + $0x38] sm:$0xff]
  %v532 = vld [vmem:[#allocation3 + $0x40] sm:$0xf]
  %v533 = vld [vmem:[#allocation3 + $0x48] sm:$0xf]
  %v534 = vpack.c.bf16 %v526, %v524
  %v535 = vpack.c.bf16 %v527, %v525
  %v536 = vpack.c.bf16 %v530, %v528
  %v537 = vpack.c.bf16 %v531, %v529
  %v538 = vpack.c.bf16 %v532, %v532
  %v539 = vpack.c.bf16 %v533, %v533
  %v541 = vsel %vm305, %v538, 0
  %v544 = vsel %vm305, %v539, 0
  %546 = vmatprep.subr.bf16.mxu0 %v535
  %547 = vmatpush1.bf16.msra.mxu0 %v534
  %548 = vmatprep.subr.bf16.mxu0 %v537
  %549 = vmatpush1.bf16.msra.mxu0 %v536
  %550 = vmatprep.subr.bf16.mxu0 %v544
  %551 = vmatpush1.bf16.msra.mxu0 %v541
  %552 = vmatprep.subr.bf16.mxu0 0
  %553 = vmatpush1.bf16.msra.mxu0 0
  %554 = vmatprep.subr.bf16.mxu0 0
  %555 = vmatpush1.bf16.msra.mxu0 0
  %556 = vmatprep.subr.bf16.mxu0 0
  %557 = vmatpush1.bf16.msra.mxu0 0
  %558 = vmatprep.subr.bf16.mxu0 0
  %559 = vmatpush1.bf16.msra.mxu0 0
  %560 = vmatprep.subr.bf16.mxu0 0
  %561 = vmatpush1.bf16.msra.mxu0 0
  %562 = vmatprep.subr.bf16.mxu0 0
  %563 = vmatpush1.bf16.msra.mxu0 0
  %564 = vmatprep.subr.bf16.mxu0 0
  %565 = vmatpush1.bf16.msra.mxu0 0
  %566 = vmatprep.subr.bf16.mxu0 0
  %567 = vmatpush1.bf16.msra.mxu0 0
  %568 = vmatprep.subr.bf16.mxu0 0
  %569 = vmatpush1.bf16.msra.mxu0 0
  %570 = vmatprep.subr.bf16.mxu0 0
  %571 = vmatpush1.bf16.msra.mxu0 0
  %572 = vmatprep.subr.bf16.mxu0 0
  %573 = vmatpush1.bf16.msra.mxu0 0
  %574 = vmatprep.subr.bf16.mxu0 0
  %575 = vmatpush1.bf16.msra.mxu0 0
  %576 = vmatprep.subr.bf16.mxu0 0
  %577 = vmatpush1.bf16.msra.mxu0 0
  %578 = vmatprep.mubr.bf16.mxu0 0
  %579 = vmatmul.mubr.bf16.gmra.mrb[0].mxu0 %v303
  %v580 = vpop.f32.mrb[0].mxu0
  %v581 = vadd.f32 0.0, %v580
  %v582 = vpop.f32.mrb[0].mxu0
  %v583 = vadd.f32 0.0, %v582
  %v584 = vpop.f32.mrb[0].mxu0
  %v585 = vpop.f32.mrb[0].mxu0
  %586 = vdwg.mxu0
  %v587 = vadd.f32 %v581, %v583
  %588 = vadd.xlane.f32.xlu0 %v587
  %v589 = vpop.xlane.xlu0 %588
  %v590 = vadd.f32 %v356, %v589
  %v591 = vmul.f32 %v581, %v581
  %v592 = vmul.f32 %v583, %v583
  %v593 = vadd.f32 %v591, %v592
  %594 = vadd.xlane.f32.xlu0 %v593
  %v595 = vpop.xlane.xlu0 %594
  %v596 = vadd.f32 %v362, %v595
  %v597 = vrcp.pop 512.0
  %v598 = vmul.f32 %v590, %v597
  %v599 = vmul.f32 %v596, %v597
  %v600 = vmul.f32 %v598, %v598
  %v601 = vsub.f32 %v599, %v600
  %v602 = vmax.f32 %v601, 0.0
  %v603 = vld [vmem:[%s2] sm:$0xff]
  %v604 = vadd.f32 %v602, 1e-05
  %v605 = vrsqrt.pop %v604
  %v606 = vmul.f32 %v603, %v605
  %v607 = vld [vmem:[%s3] sm:$0xff]
  %v608 = vmul.f32 %v598, %v606
  %v609 = vsub.f32 %v607, %v608
  %611 = vset.pattern.permute.xlu0 0
  %612 = vperm.xlu0 %611, %v606
  %v613 = vpop.permute.xlu0 %612
  %v615 = vmul.f32 %v347, %v613
  %v616 = vmul.f32 %v349, %v613
  %618 = vset.pattern.permute.xlu0 0
  %619 = vperm.xlu0 %618, %v609
  %v620 = vpop.permute.xlu0 %619
  %v622 = vadd.f32 %v615, %v620
  %v623 = vadd.f32 %v616, %v620
  %v624 = vmax.f32 %v622, 0.0
  %v625 = vmax.f32 %v623, 0.0
  %626 = vst [vmem:[%s4] sm:$0xff] %v624
  %627 = vst [vmem:[%s4 + $0x8] sm:$0xff] %v625
  %v628 = vmul.f32 %v581, %v613
  %v629 = vmul.f32 %v583, %v613
  %v630 = vadd.f32 %v628, %v620
  %v631 = vadd.f32 %v629, %v620
  %v632 = vmax.f32 %v630, 0.0
  %v633 = vmax.f32 %v631, 0.0
  %s634 = scalar_lea.vmem %s4, 16
  %635 = vst [vmem:[%s634] sm:$0xff] %v632
  %636 = vst [vmem:[%s634 + $0x8] sm:$0xff] %v633
  // Predicated region
  $region18: #{convblock_forward.1} parent=0 // pred_check
    _
  $region19: #{convblock_forward.1} parent=0 // pred_check_branch
    %638 = sbr.rel (0) target = $region21
  $region20: #{convblock_forward.1} parent=0 // pred_region
    _
  $region21: #{convblock_forward.1} parent=0 // pred_fallthru
    _
  // Predicated region
  $region22: #{convblock_forward.1} parent=0 // pred_check
    _
  $region23: #{convblock_forward.1} parent=0 // pred_check_branch
    %640 = sbr.rel (0) target = $region25
  $region24: #{convblock_forward.1} parent=0 // pred_region
    _
  $region25: #{convblock_forward.1} parent=0 // pred_fallthru
    _

</llo_original>
